<compile_context>
chip_gen: v7x
topology: tpu7x:2x2x1
jax: 0.10.0
libtpu: 0.0.40
codegen_flags: <defaults>
</compile_context>

<pallas_src>
import math
import functools

import jax
import jax.numpy as jnp
from jax import lax
from jax.experimental import pallas as pl
from jax.experimental.pallas import tpu as pltpu


def _self_attention_kernel(x_ref, g_ref, b_ref, wqkv_ref, wp_ref, bp_ref, o_ref,
                           xn_ref, acc_ref, *, head_size, ln_eps, mxu_dtype):
    """Grid = (batch, head).  One head of one batch element per step.

    x_ref    : (1, T, C)     residual-stream input
    g_ref    : (1, C)        LayerNorm gamma (f32)
    b_ref    : (1, C)        LayerNorm beta  (f32)
    wqkv_ref : (1, C, 3*hs)  this head's packed [Wq^T/sqrt(hs) | Wk^T | Wv^T]
    wp_ref   : (1, hs, C)    this head's slice of Wproj^T
    bp_ref   : (1, C)        projection bias (f32)
    o_ref    : (1, T, C)     output = x + proj(concat_h attn_h(LN(x))) + bias
    xn_ref   : (T, C)        VMEM scratch: LayerNorm(x), cached in mxu_dtype
    acc_ref  : (T, C)        VMEM scratch: f32 accumulator over heads
    """
    h = pl.program_id(1)
    nh = pl.num_programs(1)
    hs = head_size

    # ---- LayerNorm once per batch element (f32 stats), cached for all heads.
    @pl.when(h == 0)
    def _():
        x = x_ref[0].astype(jnp.float32)                          # (T, C)
        mean = jnp.mean(x, axis=-1, keepdims=True)
        var = jnp.mean((x - mean) ** 2, axis=-1, keepdims=True)
        xn = (x - mean) * lax.rsqrt(var + ln_eps)
        xn_ref[...] = (xn * g_ref[0] + b_ref[0]).astype(mxu_dtype)
        acc_ref[...] = jnp.zeros_like(acc_ref)

    xn = xn_ref[...]                                              # (T, C)
    T = xn.shape[0]

    # ---- this head's q/k/v: one full-K (T,C)@(C,3hs) MXU matmul.
    # 1/sqrt(hs) is pre-folded into the Wq columns.  Cast to mxu_dtype before
    # the three static lane slices so the (cheap) split moves half the bytes.
    qkv = jnp.dot(xn, wqkv_ref[0],
                  preferred_element_type=jnp.float32).astype(mxu_dtype)  # (T, 3hs)
    q = qkv[:, 0 * hs:1 * hs]
    k = qkv[:, 1 * hs:2 * hs]
    v = qkv[:, 2 * hs:3 * hs]

    # ---- scores = (q/sqrt(hs)) @ k^T, causal mask, f32 softmax statistics.
    att = lax.dot_general(q, k, (((1,), (1,)), ((), ())),
                          preferred_element_type=jnp.float32)            # (T, T)
    row = lax.broadcasted_iota(jnp.int32, (T, T), 0)
    col = lax.broadcasted_iota(jnp.int32, (T, T), 1)
    # -1e30 (not -inf) is safe because every causal row has >= 1 valid key.
    att = jnp.where(row >= col, att, jnp.float32(-1e30))
    att = att - jnp.max(att, axis=-1, keepdims=True)
    p = jnp.exp(att)
    p = p * pl.reciprocal(jnp.sum(p, axis=-1, keepdims=True), approx=True)

    y = jnp.dot(p.astype(mxu_dtype), v, preferred_element_type=jnp.float32)  # (T, hs)

    # ---- per-head output projection, accumulated in f32 (== concat + proj).
    acc_ref[...] += jnp.dot(y.astype(mxu_dtype), wp_ref[0],
                            preferred_element_type=jnp.float32)          # (T, C)

    # ---- finalize: bias + residual on the last head.
    @pl.when(h == nh - 1)
    def _():
        out = x_ref[0].astype(jnp.float32) + acc_ref[...] + bp_ref[0]
        o_ref[0] = out.astype(o_ref.dtype)


def self_attention(x, gamma, beta, wq, wk, wv, wp, bp,
                   *, n_head, ln_eps=1e-5, mxu_dtype=jnp.bfloat16):
    """x: (B, T, C).  Weights in PyTorch (out, in) layout.  Returns (B, T, C)."""
    B, T, C = x.shape
    hs = C // n_head
    scale = 1.0 / math.sqrt(hs)

    # Host-side weight packing: per-head right-multipliers, no in-kernel
    # transposes, softmax scale folded into Wq.
    def per_head_rhs(w):                                   # (C, C) torch (out,in)
        return jnp.transpose(w.T.reshape(C, n_head, hs), (1, 0, 2))   # (nh, C, hs)

    wqkv = jnp.concatenate(
        [per_head_rhs(wq) * jnp.float32(scale), per_head_rhs(wk), per_head_rhs(wv)],
        axis=-1).astype(mxu_dtype)                                     # (nh, C, 3*hs)
    wp_heads = wp.T.reshape(n_head, hs, C).astype(mxu_dtype)           # (nh, hs, C)

    gamma2 = gamma.reshape(1, C).astype(jnp.float32)
    beta2 = beta.reshape(1, C).astype(jnp.float32)
    bp2 = bp.reshape(1, C).astype(jnp.float32)

    kernel = functools.partial(_self_attention_kernel, head_size=hs,
                               ln_eps=ln_eps, mxu_dtype=mxu_dtype)

    # VMEM budget from actual block / scratch / intermediate sizes (+ slack).
    w_item = jnp.dtype(mxu_dtype).itemsize
    x_item = jnp.dtype(x.dtype).itemsize
    vmem_est = (4 * T * C * x_item                      # x + out blocks, 2-buffered
                + T * C * (w_item + 4)                  # xn + acc scratch
                + 4 * (C * 3 * hs + hs * C) * w_item    # per-head weights, 2-buffered
                + 3 * T * T * 4                         # scores / probs headroom
                + (2 << 20))
    vmem_limit = int(min(max(vmem_est, 4 << 20), 100 << 20))

    return pl.pallas_call(
        kernel,
        out_shape=jax.ShapeDtypeStruct((B, T, C), x.dtype),
        grid_spec=pltpu.PrefetchScalarGridSpec(
            num_scalar_prefetch=0,
            grid=(B, n_head),
            in_specs=[
                pl.BlockSpec((1, T, C), lambda b, h: (b, 0, 0)),        # x
                pl.BlockSpec((1, C), lambda b, h: (0, 0)),              # gamma
                pl.BlockSpec((1, C), lambda b, h: (0, 0)),              # beta
                pl.BlockSpec((1, C, 3 * hs), lambda b, h: (h, 0, 0)),   # Wqkv[h]
                pl.BlockSpec((1, hs, C), lambda b, h: (h, 0, 0)),       # Wproj[h]
                pl.BlockSpec((1, C), lambda b, h: (0, 0)),              # bproj
            ],
            out_specs=pl.BlockSpec((1, T, C), lambda b, h: (b, 0, 0)),
            scratch_shapes=[
                pltpu.VMEM((T, C), mxu_dtype),     # LayerNorm(x) cache
                pltpu.VMEM((T, C), jnp.float32),   # head-sum accumulator
            ],
        ),
        compiler_params=pltpu.CompilerParams(
            dimension_semantics=("parallel", "arbitrary"),
            vmem_limit_bytes=vmem_limit,
        ),
    )(x, gamma2, beta2, wqkv, wp_heads, bp2)


def _reference(x, gamma, beta, wq, wk, wv, wp, bp, *, n_head, ln_eps=1e-5):
    """Pure-JAX f32 reference mirroring the PyTorch forward (eval mode)."""
    B, T, C = x.shape
    hs = C // n_head
    mean = jnp.mean(x, axis=-1, keepdims=True)
    var = jnp.mean((x - mean) ** 2, axis=-1, keepdims=True)
    xn = (x - mean) / jnp.sqrt(var + ln_eps) * gamma + beta
    q = xn @ wq.T
    k = xn @ wk.T
    v = xn @ wv.T
    outs = []
    causal = jnp.tril(jnp.ones((T, T), dtype=bool))
    for h in range(n_head):
        sl = slice(h * hs, (h + 1) * hs)
        att = q[:, :, sl] @ jnp.swapaxes(k[:, :, sl], -1, -2) / math.sqrt(hs)
        att = jnp.where(causal[None], att, -jnp.inf)
        att = jax.nn.softmax(att, axis=-1)
        outs.append(att @ v[:, :, sl])
    y = jnp.concatenate(outs, axis=-1)
    return x + (y @ wp.T + bp)


if __name__ == "__main__":
    # small config consistent with the module: n_embd=32, n_head=4, T=8, B=2
    B, T, C, n_head = 2, 8, 32, 4

    key = jax.random.PRNGKey(0)
    ks = jax.random.split(key, 7)
    x = jax.random.normal(ks[0], (B, T, C), dtype=jnp.float32)

    # deterministic synthetic weights (PyTorch (out, in) layout)
    wq = 0.02 * jax.random.normal(ks[1], (C, C), dtype=jnp.float32)
    wk = 0.02 * jax.random.normal(ks[2], (C, C), dtype=jnp.float32)
    wv = 0.02 * jax.random.normal(ks[3], (C, C), dtype=jnp.float32)
    wp = 0.02 * jax.random.normal(ks[4], (C, C), dtype=jnp.float32)
    bp = 0.02 * jax.random.normal(ks[5], (C,), dtype=jnp.float32)
    gamma = jnp.ones((C,), dtype=jnp.float32)
    beta = jnp.zeros((C,), dtype=jnp.float32)

    ref = _reference(x, gamma, beta, wq, wk, wv, wp, bp, n_head=n_head)

    # default path: bf16 MXU operands, f32 accumulation / statistics
    out_bf16 = self_attention(x, gamma, beta, wq, wk, wv, wp, bp, n_head=n_head)
    out_bf16 = jax.block_until_ready(out_bf16)
    assert out_bf16.shape == (B, T, C)
    assert jnp.allclose(out_bf16, ref, atol=2e-2, rtol=2e-2), "bf16 path mismatch vs reference"

    # full-f32 path (tight tolerance sanity check)
    out_f32 = self_attention(x, gamma, beta, wq, wk, wv, wp, bp,
                             n_head=n_head, mxu_dtype=jnp.float32)
    out_f32 = jax.block_until_ready(out_f32)
    assert jnp.allclose(out_f32, ref, atol=2e-3, rtol=2e-3), "f32 path mismatch vs reference"

    print("KERNEL_OK")
</pallas_src>

<mosaic_0001>
module attributes {stable_mosaic.version = 11 : i64} {
  func.func @_self_attention_kernel(%arg0: i32, %arg1: i32, %arg2: memref<1x8x32xf32, #tpu.memory_space<vmem>>, %arg3: memref<1x32xf32, #tpu.memory_space<vmem>>, %arg4: memref<1x32xf32, #tpu.memory_space<vmem>>, %arg5: memref<1x32x24xbf16, #tpu.memory_space<vmem>>, %arg6: memref<1x8x32xbf16, #tpu.memory_space<vmem>>, %arg7: memref<1x32xf32, #tpu.memory_space<vmem>>, %arg8: memref<1x8x32xf32, #tpu.memory_space<vmem>>, %arg9: memref<8x32xbf16, #tpu.memory_space<vmem>>, %arg10: memref<8x32xf32, #tpu.memory_space<vmem>>) attributes {dimension_semantics = [#tpu.dimension_semantics<parallel>, #tpu.dimension_semantics<arbitrary>], iteration_bounds = array<i64: 2, 4>, scalar_prefetch = 0 : i64, scratch_operands = 2 : i64, tpu.core_type = #tpu.core_type<tc>, window_params = [{transform_indices = @transform_0, window_bounds = array<i64: 1, 8, 32>}, {pipeline_mode = #tpu.pipeline_mode<synchronous>, transform_indices = @transform_1, window_bounds = array<i64: 1, 32>}, {pipeline_mode = #tpu.pipeline_mode<synchronous>, transform_indices = @transform_2, window_bounds = array<i64: 1, 32>}, {transform_indices = @transform_3, window_bounds = array<i64: 1, 32, 24>}, {transform_indices = @transform_4, window_bounds = array<i64: 1, 8, 32>}, {pipeline_mode = #tpu.pipeline_mode<synchronous>, transform_indices = @transform_5, window_bounds = array<i64: 1, 32>}, {transform_indices = @transform_6, window_bounds = array<i64: 1, 8, 32>}]} {
    %c0_i32 = arith.constant 0 : i32
    %0 = arith.cmpi eq, %arg1, %c0_i32 : i32
    %1 = arith.extui %0 : i1 to i32
    %c0_i32_0 = arith.constant 0 : i32
    %2 = arith.cmpi ne, %1, %c0_i32_0 : i32
    scf.if %2 {
      %c0_19 = arith.constant 0 : index
      %c0_20 = arith.constant 0 : index
      %c0_21 = arith.constant 0 : index
      %39 = vector.load %arg2[%c0_19, %c0_20, %c0_21] : memref<1x8x32xf32, #tpu.memory_space<vmem>>, vector<1x8x32xf32>
      %40 = vector.shape_cast %39 : vector<1x8x32xf32> to vector<8x32xf32>
      %cst_22 = arith.constant dense<0.000000e+00> : vector<8xf32>
      %41 = vector.multi_reduction <add>, %40, %cst_22 [1] : vector<8x32xf32> to vector<8xf32>
      %42 = vector.shape_cast %41 : vector<8xf32> to vector<8x1xf32>
      %cst_23 = arith.constant 3.200000e+01 : f32
      %43 = vector.broadcast %cst_23 : f32 to vector<8x1xf32>
      %44 = arith.divf %42, %43 : vector<8x1xf32>
      %45 = vector.broadcast %44 : vector<8x1xf32> to vector<8x32xf32>
      %46 = arith.subf %40, %45 : vector<8x32xf32>
      %47 = arith.mulf %46, %46 : vector<8x32xf32>
      %cst_24 = arith.constant dense<0.000000e+00> : vector<8xf32>
      %48 = vector.multi_reduction <add>, %47, %cst_24 [1] : vector<8x32xf32> to vector<8xf32>
      %49 = vector.shape_cast %48 : vector<8xf32> to vector<8x1xf32>
      %cst_25 = arith.constant 3.200000e+01 : f32
      %50 = vector.broadcast %cst_25 : f32 to vector<8x1xf32>
      %51 = arith.divf %49, %50 : vector<8x1xf32>
      %52 = vector.broadcast %44 : vector<8x1xf32> to vector<8x32xf32>
      %53 = arith.subf %40, %52 : vector<8x32xf32>
      %cst_26 = arith.constant 9.99999974E-6 : f32
      %54 = vector.broadcast %cst_26 : f32 to vector<8x1xf32>
      %55 = arith.addf %51, %54 : vector<8x1xf32>
      %56 = math.rsqrt %55 : vector<8x1xf32>
      %57 = vector.broadcast %56 : vector<8x1xf32> to vector<8x32xf32>
      %58 = arith.mulf %53, %57 : vector<8x32xf32>
      %c0_27 = arith.constant 0 : index
      %c0_28 = arith.constant 0 : index
      %59 = vector.load %arg3[%c0_27, %c0_28] : memref<1x32xf32, #tpu.memory_space<vmem>>, vector<1x32xf32>
      %60 = vector.shape_cast %59 : vector<1x32xf32> to vector<32xf32>
      %61 = vector.shape_cast %60 : vector<32xf32> to vector<1x32xf32>
      %62 = vector.broadcast %61 : vector<1x32xf32> to vector<8x32xf32>
      %63 = arith.mulf %58, %62 : vector<8x32xf32>
      %c0_29 = arith.constant 0 : index
      %c0_30 = arith.constant 0 : index
      %64 = vector.load %arg4[%c0_29, %c0_30] : memref<1x32xf32, #tpu.memory_space<vmem>>, vector<1x32xf32>
      %65 = vector.shape_cast %64 : vector<1x32xf32> to vector<32xf32>
      %66 = vector.shape_cast %65 : vector<32xf32> to vector<1x32xf32>
      %67 = vector.broadcast %66 : vector<1x32xf32> to vector<8x32xf32>
      %68 = arith.addf %63, %67 : vector<8x32xf32>
      %69 = arith.truncf %68 : vector<8x32xf32> to vector<8x32xbf16>
      %c0_31 = arith.constant 0 : index
      %c0_32 = arith.constant 0 : index
      %70 = vector.load %arg9[%c0_31, %c0_32] : memref<8x32xbf16, #tpu.memory_space<vmem>>, vector<8x32xbf16>
      tpu.vector_store %arg9[%c0_31, %c0_32], %69 {strides = array<i32>} : memref<8x32xbf16, #tpu.memory_space<vmem>>, vector<8x32xbf16>,
      %cst_33 = arith.constant 0.000000e+00 : f32
      %71 = vector.broadcast %cst_33 : f32 to vector<8x32xf32>
      %c0_34 = arith.constant 0 : index
      %c0_35 = arith.constant 0 : index
      %72 = vector.load %arg10[%c0_34, %c0_35] : memref<8x32xf32, #tpu.memory_space<vmem>>, vector<8x32xf32>
      tpu.vector_store %arg10[%c0_34, %c0_35], %71 {strides = array<i32>} : memref<8x32xf32, #tpu.memory_space<vmem>>, vector<8x32xf32>,
    } else {
    }
    %c0 = arith.constant 0 : index
    %c0_1 = arith.constant 0 : index
    %3 = vector.load %arg9[%c0, %c0_1] : memref<8x32xbf16, #tpu.memory_space<vmem>>, vector<8x32xbf16>
    %c0_2 = arith.constant 0 : index
    %c0_3 = arith.constant 0 : index
    %c0_4 = arith.constant 0 : index
    %4 = vector.load %arg5[%c0_2, %c0_3, %c0_4] : memref<1x32x24xbf16, #tpu.memory_space<vmem>>, vector<1x32x24xbf16>
    %5 = vector.shape_cast %4 : vector<1x32x24xbf16> to vector<32x24xbf16>
    %cst = arith.constant dense<0.000000e+00> : vector<8x24xf32>
    %6 = tpu.matmul %3, %5, %cst {dimension_numbers = #tpu.dot_dimension_numbers<[1], [0], [0], [1], [0, 0, 1, 1], [], []>} : vector<8x32xbf16>, vector<32x24xbf16>, vector<8x24xf32> -> vector<8x24xf32>
    %7 = arith.truncf %6 : vector<8x24xf32> to vector<8x24xbf16>
    %8 = vector.extract_strided_slice %7 {offsets = [0, 0], sizes = [8, 8], strides = [1, 1]} : vector<8x24xbf16> to vector<8x8xbf16>
    %9 = vector.extract_strided_slice %7 {offsets = [0, 8], sizes = [8, 8], strides = [1, 1]} : vector<8x24xbf16> to vector<8x8xbf16>
    %10 = vector.extract_strided_slice %7 {offsets = [0, 16], sizes = [8, 8], strides = [1, 1]} : vector<8x24xbf16> to vector<8x8xbf16>
    %cst_5 = arith.constant dense<0.000000e+00> : vector<8x8xf32>
    %11 = tpu.matmul %8, %9, %cst_5 {dimension_numbers = #tpu.dot_dimension_numbers<[1], [1], [0], [0], [0, 0, 1, 0], [], []>} : vector<8x8xbf16>, vector<8x8xbf16>, vector<8x8xf32> -> vector<8x8xf32>
    %12 = tpu.iota {dimensions = array<i32: 0>} : vector<8x8xi32>
    %13 = tpu.iota {dimensions = array<i32: 1>} : vector<8x8xi32>
    %14 = arith.cmpi sge, %12, %13 : vector<8x8xi32>
    %cst_6 = arith.constant -1.000000e+30 : f32
    %15 = vector.broadcast %cst_6 : f32 to vector<8x8xf32>
    %16 = arith.select %14, %11, %15 : vector<8x8xi1>, vector<8x8xf32>
    %cst_7 = arith.constant dense<0xFF800000> : vector<8xf32>
    %17 = vector.multi_reduction <maximumf>, %16, %cst_7 [1] : vector<8x8xf32> to vector<8xf32>
    %18 = vector.shape_cast %17 : vector<8xf32> to vector<8x1xf32>
    %19 = vector.broadcast %18 : vector<8x1xf32> to vector<8x8xf32>
    %20 = arith.subf %16, %19 : vector<8x8xf32>
    %21 = math.exp %20 : vector<8x8xf32>
    %cst_8 = arith.constant dense<0.000000e+00> : vector<8xf32>
    %22 = vector.multi_reduction <add>, %21, %cst_8 [1] : vector<8x8xf32> to vector<8xf32>
    %23 = vector.shape_cast %22 : vector<8xf32> to vector<8x1xf32>
    %24 = tpu.reciprocal %23 {approx = true} : vector<8x1xf32> -> vector<8x1xf32>
    %25 = vector.broadcast %24 : vector<8x1xf32> to vector<8x8xf32>
    %26 = arith.mulf %21, %25 : vector<8x8xf32>
    %27 = arith.truncf %26 : vector<8x8xf32> to vector<8x8xbf16>
    %cst_9 = arith.constant dense<0.000000e+00> : vector<8x8xf32>
    %28 = tpu.matmul %27, %10, %cst_9 {dimension_numbers = #tpu.dot_dimension_numbers<[1], [0], [0], [1], [0, 0, 1, 1], [], []>} : vector<8x8xbf16>, vector<8x8xbf16>, vector<8x8xf32> -> vector<8x8xf32>
    %c0_10 = arith.constant 0 : index
    %c0_11 = arith.constant 0 : index
    %29 = vector.load %arg10[%c0_10, %c0_11] : memref<8x32xf32, #tpu.memory_space<vmem>>, vector<8x32xf32>
    %30 = arith.truncf %28 : vector<8x8xf32> to vector<8x8xbf16>
    %c0_12 = arith.constant 0 : index
    %c0_13 = arith.constant 0 : index
    %c0_14 = arith.constant 0 : index
    %31 = vector.load %arg6[%c0_12, %c0_13, %c0_14] : memref<1x8x32xbf16, #tpu.memory_space<vmem>>, vector<1x8x32xbf16>
    %32 = vector.shape_cast %31 : vector<1x8x32xbf16> to vector<8x32xbf16>
    %cst_15 = arith.constant dense<0.000000e+00> : vector<8x32xf32>
    %33 = tpu.matmul %30, %32, %cst_15 {dimension_numbers = #tpu.dot_dimension_numbers<[1], [0], [0], [1], [0, 0, 1, 1], [], []>} : vector<8x8xbf16>, vector<8x32xbf16>, vector<8x32xf32> -> vector<8x32xf32>
    %34 = arith.addf %29, %33 : vector<8x32xf32>
    %c0_16 = arith.constant 0 : index
    %c0_17 = arith.constant 0 : index
    %35 = vector.load %arg10[%c0_16, %c0_17] : memref<8x32xf32, #tpu.memory_space<vmem>>, vector<8x32xf32>
    tpu.vector_store %arg10[%c0_16, %c0_17], %34 {strides = array<i32>} : memref<8x32xf32, #tpu.memory_space<vmem>>, vector<8x32xf32>,
    %c3_i32 = arith.constant 3 : i32
    %36 = arith.cmpi eq, %arg1, %c3_i32 : i32
    %37 = arith.extui %36 : i1 to i32
    %c0_i32_18 = arith.constant 0 : i32
    %38 = arith.cmpi ne, %37, %c0_i32_18 : i32
    scf.if %38 {
      %c0_19 = arith.constant 0 : index
      %c0_20 = arith.constant 0 : index
      %c0_21 = arith.constant 0 : index
      %39 = vector.load %arg2[%c0_19, %c0_20, %c0_21] : memref<1x8x32xf32, #tpu.memory_space<vmem>>, vector<1x8x32xf32>
      %40 = vector.shape_cast %39 : vector<1x8x32xf32> to vector<8x32xf32>
      %c0_22 = arith.constant 0 : index
      %c0_23 = arith.constant 0 : index
      %41 = vector.load %arg10[%c0_22, %c0_23] : memref<8x32xf32, #tpu.memory_space<vmem>>, vector<8x32xf32>
      %42 = arith.addf %40, %41 : vector<8x32xf32>
      %c0_24 = arith.constant 0 : index
      %c0_25 = arith.constant 0 : index
      %43 = vector.load %arg7[%c0_24, %c0_25] : memref<1x32xf32, #tpu.memory_space<vmem>>, vector<1x32xf32>
      %44 = vector.shape_cast %43 : vector<1x32xf32> to vector<32xf32>
      %45 = vector.shape_cast %44 : vector<32xf32> to vector<1x32xf32>
      %46 = vector.broadcast %45 : vector<1x32xf32> to vector<8x32xf32>
      %47 = arith.addf %42, %46 : vector<8x32xf32>
      %c0_26 = arith.constant 0 : index
      %c0_27 = arith.constant 0 : index
      %c0_28 = arith.constant 0 : index
      %48 = vector.load %arg8[%c0_26, %c0_27, %c0_28] : memref<1x8x32xf32, #tpu.memory_space<vmem>>, vector<1x8x32xf32>
      %49 = vector.shape_cast %48 : vector<1x8x32xf32> to vector<8x32xf32>
      %50 = vector.shape_cast %47 : vector<8x32xf32> to vector<1x8x32xf32>
      tpu.vector_store %arg8[%c0_26, %c0_27, %c0_28], %50 {strides = array<i32>} : memref<1x8x32xf32, #tpu.memory_space<vmem>>, vector<1x8x32xf32>,
    } else {
    }
    return
  }
  func.func @transform_0(%arg0: i32, %arg1: i32) -> (i32, i32, i32) {
    %c0_i32 = arith.constant 0 : i32
    %c0_i32_0 = arith.constant 0 : i32
    %c0_i32_1 = arith.constant 0 : i32
    return %arg0, %c0_i32, %c0_i32_0 : i32, i32, i32
  }
  func.func @transform_1(%arg0: i32, %arg1: i32) -> (i32, i32) {
    %c0_i32 = arith.constant 0 : i32
    %c0_i32_0 = arith.constant 0 : i32
    %c0_i32_1 = arith.constant 0 : i32
    return %c0_i32, %c0_i32_0 : i32, i32
  }
  func.func @transform_2(%arg0: i32, %arg1: i32) -> (i32, i32) {
    %c0_i32 = arith.constant 0 : i32
    %c0_i32_0 = arith.constant 0 : i32
    %c0_i32_1 = arith.constant 0 : i32
    return %c0_i32, %c0_i32_0 : i32, i32
  }
  func.func @transform_3(%arg0: i32, %arg1: i32) -> (i32, i32, i32) {
    %c0_i32 = arith.constant 0 : i32
    %c0_i32_0 = arith.constant 0 : i32
    %c0_i32_1 = arith.constant 0 : i32
    return %arg1, %c0_i32, %c0_i32_0 : i32, i32, i32
  }
  func.func @transform_4(%arg0: i32, %arg1: i32) -> (i32, i32, i32) {
    %c0_i32 = arith.constant 0 : i32
    %c0_i32_0 = arith.constant 0 : i32
    %c0_i32_1 = arith.constant 0 : i32
    return %arg1, %c0_i32, %c0_i32_0 : i32, i32, i32
  }
  func.func @transform_5(%arg0: i32, %arg1: i32) -> (i32, i32) {
    %c0_i32 = arith.constant 0 : i32
    %c0_i32_0 = arith.constant 0 : i32
    %c0_i32_1 = arith.constant 0 : i32
    return %c0_i32, %c0_i32_0 : i32, i32
  }
  func.func @transform_6(%arg0: i32, %arg1: i32) -> (i32, i32, i32) {
    %c0_i32 = arith.constant 0 : i32
    %c0_i32_0 = arith.constant 0 : i32
    %c0_i32_1 = arith.constant 0 : i32
    return %arg0, %c0_i32, %c0_i32_0 : i32, i32, i32
  }
}

</mosaic_0001>

<llo_original>
// kernel: tpu_custom_call.1
$region0: #{tpu_custom_call.1}
  #allocation0 [shape = 'u32[]', space=smem, size = 0x4, offset = 0x4, fixed_abs, tag = 'smem constant byte address 0x4 - core index']
  #allocation1 [shape = 'u32[144,128]{1,0:T(1,128)}', space=vmem, size = 0x12000, scoped, tag = 'internal scratch']
  #allocation2 [shape = 'bf16[8,32]{1,0:T(8,128)(2,1)}', space=vmem, size = 0x800, scoped, tag = 'scratch operand']
  #allocation3 [shape = 'f32[8,32]{1,0:T(8,128)}', space=vmem, size = 0x1000, scoped, tag = 'scratch operand']
  %s0 = inlined_call_operand.vmem [shape: f32[2,8,32], index: 0, kind: input, shape index: {}]
  %s1 = inlined_call_operand.vmem [shape: f32[1,32], index: 1, kind: input, shape index: {}]
  %s2 = inlined_call_operand.vmem [shape: f32[1,32], index: 2, kind: input, shape index: {}]
  %s3 = inlined_call_operand.vmem [shape: bf16[4,32,24], index: 3, kind: input, shape index: {}]
  %s4 = inlined_call_operand.vmem [shape: bf16[4,8,32], index: 4, kind: input, shape index: {}]
  %s5 = inlined_call_operand.vmem [shape: f32[1,32], index: 5, kind: input, shape index: {}]
  %s6 = inlined_call_operand.hbm [shape: f32[2,8,32], index: 6, kind: output, shape index: {}]
  %s7 = sld [smem:[#allocation0]]
  $region65: #{tpu_custom_call.1} parent=0
    _
  %s9 = ssub.s32 1, %s7
  %s10 = scalar_select 0, %s9, %s7
  $region1: #{tpu_custom_call.1} parent=0
    #allocation4 [shape = 'u8[8192]{0}', space=vmem, size = 0x2000, scoped, tag = 'output window, operand 0']
    #allocation5 [shape = 's32[2]{0}', space=sflag, size = 0x8, scoped, tag = 'scoped memory for tpu_custom_call.1']
    %11 = vsyncpa [#allocation5], 0
    %s12 = scalar_lea.sflag [#allocation5], 1
    %13 = vsyncpa %s12, 0
    loop: start=0, step=1, limit=10
    $region2: #{tpu_custom_call.1} parent=1 // loop_pre_header
      _
    $region3: #{tpu_custom_call.1} parent=1 // loop_header
      %s15 = sphi 0, %s19
      %p16 = scmp.ge.s32.totalorder %s15, 10
      %s22 = sphi 0, %s34
      %s23 = sphi 0, %s30
      %s24 = sphi 0, %s22
      %s25 = sphi 0, %s23
      %s26 = sphi 0, %s24
      %s27 = sphi 0, %s25
      %s37 = sphi 0, %s39
      %s40 = sphi 0, %s37
      %s41 = sphi 0, %s40
      %s57 = sphi 0, %s41
      %s61 = sphi 0, %s61
      %s63 = sphi 0, %s61
      %s64 = sphi 0, %s63
      %s78 = sphi 0, %s64
      %s82 = sphi 0, %s82
      %s84 = sphi 0, %s82
      %s85 = sphi 0, %s84
      %s99 = sphi 0, %s85
      %s105 = sphi 0, %s107
      %s108 = sphi 0, %s105
      %s109 = sphi 0, %s108
      %s125 = sphi 0, %s109
      %s131 = sphi 0, %s133
      %s134 = sphi 0, %s131
      %s135 = sphi 0, %s134
      %s151 = sphi 0, %s135
      %s155 = sphi 0, %s155
      %s157 = sphi 0, %s155
      %s158 = sphi 0, %s157
      %s172 = sphi 0, %s158
      %s178 = sphi 0, %s180
      %s181 = sphi 0, %s178
      %s182 = sphi 0, %s181
      %s198 = sphi 0, %s182
    $region4: #{tpu_custom_call.1} parent=1 // loop_header_branch
      %18 = sbr.rel (%p16) target = $region8
    $region5: #{tpu_custom_call.1} parent=1 // loop_body
      %s20 = ssub.s32 %s15, 1
      %s21 = ssub.s32 %s15, 2
      %s28 = sadd.s32 1, %s23
      %p29 = scmp.ge.s32.totalorder %s28, 4
      %s30 = scalar_select %p29, 0, %s28
      %s31 = sadd.s32 1, %s22
      %s32 = scalar_select %p29, %s31, %s22
      %p33 = scmp.ge.s32.totalorder %s32, 2
      %s34 = scalar_select %p33, 0, %s32
      %s35 = ssub.s32 %s22, %s34
      %p36 = scmp.eq.s32.totalorder %s35, 0
      %s38 = sadd.s32 %s37, 1
      %s39 = scalar_select %p36, %s37, %s38
      %p42 = pneg %p36
      %p43 = scmp.eq.s32.totalorder %s15, 7
      %p44 = por %p42, %p43
      %p45 = scmp.ne.s32.totalorder %s37, %s40
      %p46 = scmp.eq.s32.totalorder %s15, 0
      %p47 = por %p45, %p46
      %p48 = scmp.ne.s32.totalorder %s37, %s40
      %p49 = scmp.eq.s32.totalorder %s20, 7
      %p50 = por %p48, %p49
      %p51 = scmp.ne.s32.totalorder %s40, %s41
      %p52 = scmp.eq.s32.totalorder %s20, 0
      %p53 = por %p51, %p52
      %p54 = scmp.ne.s32.totalorder %s40, %s41
      %p55 = scmp.eq.s32.totalorder %s21, 7
      %p56 = por %p54, %p55
      %p58 = scmp.ne.s32.totalorder %s41, %s57
      %p59 = scmp.eq.s32.totalorder %s21, 0
      %p60 = por %p58, %p59
      %s62 = sadd.s32 %s61, 1
      %p65 = scmp.eq.s32.totalorder %s15, 7
      %p66 = scmp.ne.s32.totalorder %s61, %s63
      %p67 = scmp.eq.s32.totalorder %s15, 0
      %p68 = por %p66, %p67
      %p69 = scmp.ne.s32.totalorder %s61, %s63
      %p70 = scmp.eq.s32.totalorder %s20, 7
      %p71 = por %p69, %p70
      %p72 = scmp.ne.s32.totalorder %s63, %s64
      %p73 = scmp.eq.s32.totalorder %s20, 0
      %p74 = por %p72, %p73
      %p75 = scmp.ne.s32.totalorder %s63, %s64
      %p76 = scmp.eq.s32.totalorder %s21, 7
      %p77 = por %p75, %p76
      %p79 = scmp.ne.s32.totalorder %s64, %s78
      %p80 = scmp.eq.s32.totalorder %s21, 0
      %p81 = por %p79, %p80
      %s83 = sadd.s32 %s82, 1
      %p86 = scmp.eq.s32.totalorder %s15, 7
      %p87 = scmp.ne.s32.totalorder %s82, %s84
      %p88 = scmp.eq.s32.totalorder %s15, 0
      %p89 = por %p87, %p88
      %p90 = scmp.ne.s32.totalorder %s82, %s84
      %p91 = scmp.eq.s32.totalorder %s20, 7
      %p92 = por %p90, %p91
      %p93 = scmp.ne.s32.totalorder %s84, %s85
      %p94 = scmp.eq.s32.totalorder %s20, 0
      %p95 = por %p93, %p94
      %p96 = scmp.ne.s32.totalorder %s84, %s85
      %p97 = scmp.eq.s32.totalorder %s21, 7
      %p98 = por %p96, %p97
      %p100 = scmp.ne.s32.totalorder %s85, %s99
      %p101 = scmp.eq.s32.totalorder %s21, 0
      %p102 = por %p100, %p101
      %s103 = ssub.s32 %s23, %s30
      %p104 = scmp.eq.s32.totalorder %s103, 0
      %s106 = sadd.s32 %s105, 1
      %s107 = scalar_select %p104, %s105, %s106
      %p110 = pneg %p104
      %p111 = scmp.eq.s32.totalorder %s15, 7
      %p112 = por %p110, %p111
      %p113 = scmp.ne.s32.totalorder %s105, %s108
      %p114 = scmp.eq.s32.totalorder %s15, 0
      %p115 = por %p113, %p114
      %p116 = scmp.ne.s32.totalorder %s105, %s108
      %p117 = scmp.eq.s32.totalorder %s20, 7
      %p118 = por %p116, %p117
      %p119 = scmp.ne.s32.totalorder %s108, %s109
      %p120 = scmp.eq.s32.totalorder %s20, 0
      %p121 = por %p119, %p120
      %p122 = scmp.ne.s32.totalorder %s108, %s109
      %p123 = scmp.eq.s32.totalorder %s21, 7
      %p124 = por %p122, %p123
      %p126 = scmp.ne.s32.totalorder %s109, %s125
      %p127 = scmp.eq.s32.totalorder %s21, 0
      %p128 = por %p126, %p127
      %s129 = ssub.s32 %s23, %s30
      %p130 = scmp.eq.s32.totalorder %s129, 0
      %s132 = sadd.s32 %s131, 1
      %s133 = scalar_select %p130, %s131, %s132
      %p136 = pneg %p130
      %p137 = scmp.eq.s32.totalorder %s15, 7
      %p138 = por %p136, %p137
      %p139 = scmp.ne.s32.totalorder %s131, %s134
      %p140 = scmp.eq.s32.totalorder %s15, 0
      %p141 = por %p139, %p140
      %p142 = scmp.ne.s32.totalorder %s131, %s134
      %p143 = scmp.eq.s32.totalorder %s20, 7
      %p144 = por %p142, %p143
      %p145 = scmp.ne.s32.totalorder %s134, %s135
      %p146 = scmp.eq.s32.totalorder %s20, 0
      %p147 = por %p145, %p146
      %p148 = scmp.ne.s32.totalorder %s134, %s135
      %p149 = scmp.eq.s32.totalorder %s21, 7
      %p150 = por %p148, %p149
      %p152 = scmp.ne.s32.totalorder %s135, %s151
      %p153 = scmp.eq.s32.totalorder %s21, 0
      %p154 = por %p152, %p153
      %s156 = sadd.s32 %s155, 1
      %p159 = scmp.eq.s32.totalorder %s15, 7
      %p160 = scmp.ne.s32.totalorder %s155, %s157
      %p161 = scmp.eq.s32.totalorder %s15, 0
      %p162 = por %p160, %p161
      %p163 = scmp.ne.s32.totalorder %s155, %s157
      %p164 = scmp.eq.s32.totalorder %s20, 7
      %p165 = por %p163, %p164
      %p166 = scmp.ne.s32.totalorder %s157, %s158
      %p167 = scmp.eq.s32.totalorder %s20, 0
      %p168 = por %p166, %p167
      %p169 = scmp.ne.s32.totalorder %s157, %s158
      %p170 = scmp.eq.s32.totalorder %s21, 7
      %p171 = por %p169, %p170
      %p173 = scmp.ne.s32.totalorder %s158, %s172
      %p174 = scmp.eq.s32.totalorder %s21, 0
      %p175 = por %p173, %p174
      %s176 = ssub.s32 %s22, %s34
      %p177 = scmp.eq.s32.totalorder %s176, 0
      %s179 = sadd.s32 %s178, 1
      %s180 = scalar_select %p177, %s178, %s179
      %p183 = pneg %p177
      %p184 = scmp.eq.s32.totalorder %s15, 7
      %p185 = por %p183, %p184
      %p186 = scmp.ne.s32.totalorder %s178, %s181
      %p187 = scmp.eq.s32.totalorder %s15, 0
      %p188 = por %p186, %p187
      %p189 = scmp.ne.s32.totalorder %s178, %s181
      %p190 = scmp.eq.s32.totalorder %s20, 7
      %p191 = por %p189, %p190
      %p192 = scmp.ne.s32.totalorder %s181, %s182
      %p193 = scmp.eq.s32.totalorder %s20, 0
      %p194 = por %p192, %p193
      %p195 = scmp.ne.s32.totalorder %s181, %s182
      %p196 = scmp.eq.s32.totalorder %s21, 7
      %p197 = por %p195, %p196
      %p199 = scmp.ne.s32.totalorder %s182, %s198
      %p200 = scmp.eq.s32.totalorder %s21, 0
      %p201 = por %p199, %p200
      %p202 = scmp.le.s32.totalorder 1, %s15
      %p203 = scmp.lt.s32.totalorder %s15, 9
      %p204 = pnand %p202, %p203
      %p205 = pneg %p204
      // Predicated region
      $region9: #{tpu_custom_call.1} parent=5 // pred_check
        _
      $region10: #{tpu_custom_call.1} parent=5 // pred_check_branch
        %207 = sbr.rel (%p204) target = $region12
      $region11: #{tpu_custom_call.1} parent=5 // pred_region
        %s208 = ssub.s32 %s15, 1
        // Predicated region
        $region13: #{tpu_custom_call.1} parent=11 // pred_check
          %p209 = pneg %p74
        $region14: #{tpu_custom_call.1} parent=11 // pred_check_branch
          %211 = sbr.rel (%p209) target = $region16
        $region15: #{tpu_custom_call.1} parent=11 // pred_region
          _
        $region16: #{tpu_custom_call.1} parent=11 // pred_fallthru
          _
        // Predicated region
        $region17: #{tpu_custom_call.1} parent=11 // pred_check
          %p212 = pneg %p95
        $region18: #{tpu_custom_call.1} parent=11 // pred_check_branch
          %214 = sbr.rel (%p212) target = $region20
        $region19: #{tpu_custom_call.1} parent=11 // pred_region
          _
        $region20: #{tpu_custom_call.1} parent=11 // pred_fallthru
          _
        // Predicated region
        $region21: #{tpu_custom_call.1} parent=11 // pred_check
          %p215 = pneg %p168
        $region22: #{tpu_custom_call.1} parent=11 // pred_check_branch
          %217 = sbr.rel (%p215) target = $region24
        $region23: #{tpu_custom_call.1} parent=11 // pred_region
          _
        $region24: #{tpu_custom_call.1} parent=11 // pred_fallthru
          _
      $region12: #{tpu_custom_call.1} parent=5 // pred_fallthru
        _
      %p218 = scmp.lt.s32.totalorder %s15, 8
      // Predicated region
      $region25: #{tpu_custom_call.1} parent=5 // pred_check
        %p219 = pneg %p218
      $region26: #{tpu_custom_call.1} parent=5 // pred_check_branch
        %221 = sbr.rel (%p219) target = $region28
      $region27: #{tpu_custom_call.1} parent=5 // pred_region
        // Predicated region
        $region29: #{tpu_custom_call.1} parent=27 // pred_check
          %p222 = pneg %p47
        $region30: #{tpu_custom_call.1} parent=27 // pred_check_branch
          %224 = sbr.rel (%p222) target = $region32
        $region31: #{tpu_custom_call.1} parent=27 // pred_region
          %p225 = scmp.lt.s32.totalorder %s22, 1
          %s226 = scalar_select %p225, %s22, 1
          %s227 = smul.addr %s226, 8
          %s228 = scalar_lea.vmem %s0, %s227
        $region32: #{tpu_custom_call.1} parent=27 // pred_fallthru
          _
        // Predicated region
        $region33: #{tpu_custom_call.1} parent=27 // pred_check
          %p229 = pneg %p115
        $region34: #{tpu_custom_call.1} parent=27 // pred_check_branch
          %231 = sbr.rel (%p229) target = $region36
        $region35: #{tpu_custom_call.1} parent=27 // pred_region
          %p232 = scmp.lt.s32.totalorder %s23, 3
          %s233 = scalar_select %p232, %s23, 3
          %s234 = smul.addr %s233, 4
          %s235 = smul.addr %s234, 4
          %s236 = scalar_lea.vmem %s3, %s235
        $region36: #{tpu_custom_call.1} parent=27 // pred_fallthru
          _
        // Predicated region
        $region37: #{tpu_custom_call.1} parent=27 // pred_check
          %p237 = pneg %p141
        $region38: #{tpu_custom_call.1} parent=27 // pred_check_branch
          %239 = sbr.rel (%p237) target = $region40
        $region39: #{tpu_custom_call.1} parent=27 // pred_region
          %p240 = scmp.lt.s32.totalorder %s23, 3
          %s241 = scalar_select %p240, %s23, 3
          %s242 = smul.addr %s241, 4
          %s243 = scalar_lea.vmem %s4, %s242
        $region40: #{tpu_custom_call.1} parent=27 // pred_fallthru
          _
      $region28: #{tpu_custom_call.1} parent=5 // pred_fallthru
        _
      %p244 = scmp.le.s32.totalorder 1, %s15
      %p245 = scmp.lt.s32.totalorder %s15, 9
      %p246 = pnand %p244, %p245
      %p247 = pneg %p246
      // Predicated region
      $region41: #{tpu_custom_call.1} parent=5 // pred_check
        _
      $region42: #{tpu_custom_call.1} parent=5 // pred_check_branch
        %249 = sbr.rel (%p246) target = $region44
      $region43: #{tpu_custom_call.1} parent=5 // pred_region
        %s250 = ssub.s32 %s15, 1
        %p251 = scmp.lt.s32.totalorder %s24, 1
        %s252 = scalar_select %p251, %s24, 1
        %s253 = smul.addr %s252, 8
        %s254 = scalar_lea.vmem %s0, %s253
        %p255 = pneg %p53
        %p256 = pneg %p50
        %p257 = pneg %p74
        %p258 = pneg %p71
        %p259 = pneg %p95
        %p260 = pneg %p92
        %p261 = scmp.lt.s32.totalorder %s25, 3
        %s262 = scalar_select %p261, %s25, 3
        %s263 = smul.addr %s262, 4
        %s264 = smul.addr %s263, 4
        %s265 = scalar_lea.vmem %s3, %s264
        %p266 = pneg %p121
        %p267 = pneg %p118
        %p268 = scmp.lt.s32.totalorder %s25, 3
        %s269 = scalar_select %p268, %s25, 3
        %s270 = smul.addr %s269, 4
        %s271 = scalar_lea.vmem %s4, %s270
        %p272 = pneg %p147
        %p273 = pneg %p144
        %p274 = pneg %p168
        %p275 = pneg %p165
        %p276 = pneg %p194
        %p277 = pneg %p191
        %s278 = sand.u32 %s181, 1
        %s279 = scalar_lea.sflag [#allocation5], %s278
        %s280 = sand.u32 %s181, 1
        %s281 = smul.addr %s280, 8
        %s282 = scalar_lea.vmem [#allocation4], %s281
        %p283 = scmp.lt.s32.totalorder %s24, 1
        %s284 = scalar_select %p283, %s24, 1
        %s285 = smul.addr %s284, 8
        %s286 = scalar_lea.vmem %s0, %s285
        %p287 = scmp.lt.s32.totalorder %s25, 3
        %s288 = scalar_select %p287, %s25, 3
        %s289 = smul.addr %s288, 4
        %s290 = smul.addr %s289, 4
        %s291 = scalar_lea.vmem %s3, %s290
        %p292 = scmp.lt.s32.totalorder %s25, 3
        %s293 = scalar_select %p292, %s25, 3
        %s294 = smul.addr %s293, 4
        %s295 = scalar_lea.vmem %s4, %s294
        %p297 = scmp.eq.s32.totalorder %s25, 0
        // Predicated region
        $region45: #{tpu_custom_call.1} parent=43 // pred_check
          %p298 = pneg %p297
        $region46: #{tpu_custom_call.1} parent=43 // pred_check_branch
          %300 = sbr.rel (%p298) target = $region48
        $region47: #{tpu_custom_call.1} parent=43 // pred_region
          %v301 = vld [vmem:[%s286] sm:$0xff]
          %vm302 = vcmask 261120
          %v303 = vsel %vm302, %v301, 0.0
          %304 = vadd.xlane.f32.xlu0 %v303
          %v305 = vpop.xlane.xlu0 %304
          %v306 = vrcp.pop 32.0
          %v307 = vmul.f32 %v305, %v306
          %v308 = vsub.f32 %v301, %v307
          %v309 = vmul.f32 %v308, %v308
          %v310 = vsel %vm302, %v309, 0.0
          %311 = vadd.xlane.f32.xlu0 %v310
          %v312 = vpop.xlane.xlu0 %311
          %v313 = vmul.f32 %v312, %v306
          %v314 = vadd.f32 %v313, 1e-05
          %v315 = vrsqrt.pop %v314
          %v316 = vmul.f32 %v308, %v315
          %v317 = vld [vmem:[%s1] sm:$0x1]
          %v319 = vlaneseq
          %v320 = vshrl.u32 %v319, 7
          %v321 = vsub.s32 0, %v320
          %v322 = vrot.slane %v317, %v321
          %v324 = vmul.f32 %v316, %v322
          %v325 = vld [vmem:[%s2] sm:$0x1]
          %v327 = vlaneseq
          %v328 = vshrl.u32 %v327, 7
          %v329 = vsub.s32 0, %v328
          %v330 = vrot.slane %v325, %v329
          %v332 = vadd.f32 %v324, %v330
          %v333 = vpack.c.bf16 %v332, %v332
          %vm334 = vcmask 257024
          %335 = vst.msk [vmem:[#allocation2] sm:$0xf] %vm334, %v333
          %336 = vst.msk [vmem:[#allocation3] sm:$0xff] %vm302, 0.0
        $region48: #{tpu_custom_call.1} parent=43 // pred_fallthru
          _
        %v337 = vld [vmem:[#allocation2] sm:$0xf]
        %v338 = vld [vmem:[%s291] sm:$0xf]
        %v339 = vld [vmem:[%s291 + $0x4] sm:$0xf]
        %v340 = vld [vmem:[%s291 + $0x8] sm:$0xf]
        %v341 = vld [vmem:[%s291 + $0xc] sm:$0xf]
        %v346 = vunpack.c.l.b16 %v338
        %v347 = vunpack.c.l.b16 %v339
        %v348 = vunpack.c.l.b16 %v340
        %v349 = vunpack.c.l.b16 %v341
        %v350 = vpack.c.b16 %v347, %v346
        %v351 = vpack.c.b16 %v349, %v348
        %vm354 = vcmask 261120
        %v356 = vsel %vm354, %v337, 0
        %358 = vmatprep.subr.bf16.mxu0 0
        %359 = vmatpush1.bf16.msra.mxu0 %v350
        %360 = vmatprep.subr.bf16.mxu0 0
        %361 = vmatpush1.bf16.msra.mxu0 %v351
        %362 = vmatprep.subr.bf16.mxu0 0
        %363 = vmatpush1.bf16.msra.mxu0 0
        %364 = vmatprep.subr.bf16.mxu0 0
        %365 = vmatpush1.bf16.msra.mxu0 0
        %366 = vmatprep.subr.bf16.mxu0 0
        %367 = vmatpush1.bf16.msra.mxu0 0
        %368 = vmatprep.subr.bf16.mxu0 0
        %369 = vmatpush1.bf16.msra.mxu0 0
        %370 = vmatprep.subr.bf16.mxu0 0
        %371 = vmatpush1.bf16.msra.mxu0 0
        %372 = vmatprep.subr.bf16.mxu0 0
        %373 = vmatpush1.bf16.msra.mxu0 0
        %374 = vmatprep.subr.bf16.mxu0 0
        %375 = vmatpush1.bf16.msra.mxu0 0
        %376 = vmatprep.subr.bf16.mxu0 0
        %377 = vmatpush1.bf16.msra.mxu0 0
        %378 = vmatprep.subr.bf16.mxu0 0
        %379 = vmatpush1.bf16.msra.mxu0 0
        %380 = vmatprep.subr.bf16.mxu0 0
        %381 = vmatpush1.bf16.msra.mxu0 0
        %382 = vmatprep.subr.bf16.mxu0 0
        %383 = vmatpush1.bf16.msra.mxu0 0
        %384 = vmatprep.subr.bf16.mxu0 0
        %385 = vmatpush1.bf16.msra.mxu0 0
        %386 = vmatprep.subr.bf16.mxu0 0
        %387 = vmatpush1.bf16.msra.mxu0 0
        %388 = vmatprep.subr.bf16.mxu0 0
        %389 = vmatpush1.bf16.msra.mxu0 0
        %390 = vmatprep.mubr.bf16.mxu0 0
        %391 = vmatmul.mubr.bf16.gmra.mrb[0].mxu0 %v356
        %v392 = vpop.f32.mrb[0].mxu0
        %v393 = vadd.f32 0.0, %v392
        %v394 = vpop.f32.mrb[0].mxu0
        %v395 = vpop.f32.mrb[0].mxu0
        %v396 = vpop.f32.mrb[0].mxu0
        %397 = vdwg.mxu0
        %v398 = vpack.c.bf16 %v393, %v393
        %400 = vrot.lane.b32.xlu0 %v398, 120
        %v401 = vpop.permute.xlu0 %400
        %vm402 = vcmask 64512
        %v404 = vsel %vm402, %v398, 0
        %v407 = vsel %vm402, %v401, 0
        %409 = vmatprep.subr.bf16.mxu0 0
        %410 = vmatpush1.bf16.xpose.msra.mxu0 %v407
        %411 = vmatprep.subr.bf16.mxu0 0
        %412 = vmatpush1.bf16.xpose.msra.mxu0 0
        %413 = vmatprep.subr.bf16.mxu0 0
        %414 = vmatpush1.bf16.xpose.msra.mxu0 0
        %415 = vmatprep.subr.bf16.mxu0 0
        %416 = vmatpush1.bf16.xpose.msra.mxu0 0
        %417 = vmatprep.subr.bf16.mxu0 0
        %418 = vmatpush1.bf16.xpose.msra.mxu0 0
        %419 = vmatprep.subr.bf16.mxu0 0
        %420 = vmatpush1.bf16.xpose.msra.mxu0 0
        %421 = vmatprep.subr.bf16.mxu0 0
        %422 = vmatpush1.bf16.xpose.msra.mxu0 0
        %423 = vmatprep.subr.bf16.mxu0 0
        %424 = vmatpush1.bf16.xpose.msra.mxu0 0
        %425 = vmatprep.subr.bf16.mxu0 0
        %426 = vmatpush1.bf16.xpose.msra.mxu0 0
        %427 = vmatprep.subr.bf16.mxu0 0
        %428 = vmatpush1.bf16.xpose.msra.mxu0 0
        %429 = vmatprep.subr.bf16.mxu0 0
        %430 = vmatpush1.bf16.xpose.msra.mxu0 0
        %431 = vmatprep.subr.bf16.mxu0 0
        %432 = vmatpush1.bf16.xpose.msra.mxu0 0
        %433 = vmatprep.subr.bf16.mxu0 0
        %434 = vmatpush1.bf16.xpose.msra.mxu0 0
        %435 = vmatprep.subr.bf16.mxu0 0
        %436 = vmatpush1.bf16.xpose.msra.mxu0 0
        %437 = vmatprep.subr.bf16.mxu0 0
        %438 = vmatpush1.bf16.xpose.msra.mxu0 0
        %439 = vmatprep.subr.bf16.mxu0 0
        %440 = vmatpush1.bf16.xpose.msra.mxu0 0
        %441 = vmatprep.mubr.bf16.mxu0 0
        %442 = vmatmul.mubr.bf16.gmra.mrb[0].mxu0 %v404
        %v443 = vpop.f32.mrb[0].mxu0
        %v444 = vadd.f32 0.0, %v443
        %v445 = vpop.f32.mrb[0].mxu0
        %v446 = vpop.f32.mrb[0].mxu0
        %v447 = vpop.f32.mrb[0].mxu0
        %448 = vdwg.mxu0
        %v449 = vlaneseq
        %v450 = vshrl.u32 %v449, 7
        %v451 = vlaneseq
        %v452 = vand.u32 %v451, 127
        %vm453 = vcmp.ge.s32.totalorder %v450, %v452
        %v454 = vsel %vm453, %v444, -1e+30
        %v455 = vsel %vm402, %v454, -inf
        %456 = vmax.xlane.f32.xlu0 %v455
        %v457 = vpop.xlane.xlu0 %456
        %v458 = vsub.f32 %v454, %v457
        %v459 = vmul.f32 %v458, 1.442695
        %v460 = vpow.pop %v459
        %v461 = vsel %vm402, %v460, 0.0
        %462 = vadd.xlane.f32.xlu0 %v461
        %v463 = vpop.xlane.xlu0 %462
        %v464 = vrcp.pop %v463
        %v465 = vmul.f32 %v460, %v464
        %v466 = vpack.c.bf16 %v465, %v465
        %467 = vrot.lane.b32.xlu0 %v398, 112
        %v468 = vpop.permute.xlu0 %467
        %v470 = vsel %vm402, %v466, 0
        %vm472 = vcmask 1043456
        %v474 = vsel %vm472, %v468, 0
        %476 = vmatprep.subr.bf16.mxu0 0
        %477 = vmatpush1.bf16.msra.mxu0 %v474
        %478 = vmatprep.subr.bf16.mxu0 0
        %479 = vmatpush1.bf16.msra.mxu0 0
        %480 = vmatprep.subr.bf16.mxu0 0
        %481 = vmatpush1.bf16.msra.mxu0 0
        %482 = vmatprep.subr.bf16.mxu0 0
        %483 = vmatpush1.bf16.msra.mxu0 0
        %484 = vmatprep.subr.bf16.mxu0 0
        %485 = vmatpush1.bf16.msra.mxu0 0
        %486 = vmatprep.subr.bf16.mxu0 0
        %487 = vmatpush1.bf16.msra.mxu0 0
        %488 = vmatprep.subr.bf16.mxu0 0
        %489 = vmatpush1.bf16.msra.mxu0 0
        %490 = vmatprep.subr.bf16.mxu0 0
        %491 = vmatpush1.bf16.msra.mxu0 0
        %492 = vmatprep.subr.bf16.mxu0 0
        %493 = vmatpush1.bf16.msra.mxu0 0
        %494 = vmatprep.subr.bf16.mxu0 0
        %495 = vmatpush1.bf16.msra.mxu0 0
        %496 = vmatprep.subr.bf16.mxu0 0
        %497 = vmatpush1.bf16.msra.mxu0 0
        %498 = vmatprep.subr.bf16.mxu0 0
        %499 = vmatpush1.bf16.msra.mxu0 0
        %500 = vmatprep.subr.bf16.mxu0 0
        %501 = vmatpush1.bf16.msra.mxu0 0
        %502 = vmatprep.subr.bf16.mxu0 0
        %503 = vmatpush1.bf16.msra.mxu0 0
        %504 = vmatprep.subr.bf16.mxu0 0
        %505 = vmatpush1.bf16.msra.mxu0 0
        %506 = vmatprep.subr.bf16.mxu0 0
        %507 = vmatpush1.bf16.msra.mxu0 0
        %508 = vmatprep.mubr.bf16.mxu0 0
        %509 = vmatmul.mubr.bf16.gmra.mrb[0].mxu0 %v470
        %v510 = vpop.f32.mrb[0].mxu0
        %v511 = vadd.f32 0.0, %v510
        %v512 = vpop.f32.mrb[0].mxu0
        %v513 = vpop.f32.mrb[0].mxu0
        %v514 = vpop.f32.mrb[0].mxu0
        %515 = vdwg.mxu0
        %v516 = vld [vmem:[#allocation3] sm:$0xff]
        %v517 = vpack.c.bf16 %v511, %v511
        %v518 = vld [vmem:[%s295] sm:$0xf]
        %v520 = vsel %vm402, %v517, 0
        %v523 = vsel %vm472, %v518, 0
        %525 = vmatprep.subr.bf16.mxu0 0
        %526 = vmatpush1.bf16.msra.mxu0 %v523
        %527 = vmatprep.subr.bf16.mxu0 0
        %528 = vmatpush1.bf16.msra.mxu0 0
        %529 = vmatprep.subr.bf16.mxu0 0
        %530 = vmatpush1.bf16.msra.mxu0 0
        %531 = vmatprep.subr.bf16.mxu0 0
        %532 = vmatpush1.bf16.msra.mxu0 0
        %533 = vmatprep.subr.bf16.mxu0 0
        %534 = vmatpush1.bf16.msra.mxu0 0
        %535 = vmatprep.subr.bf16.mxu0 0
        %536 = vmatpush1.bf16.msra.mxu0 0
        %537 = vmatprep.subr.bf16.mxu0 0
        %538 = vmatpush1.bf16.msra.mxu0 0
        %539 = vmatprep.subr.bf16.mxu0 0
        %540 = vmatpush1.bf16.msra.mxu0 0
        %541 = vmatprep.subr.bf16.mxu0 0
        %542 = vmatpush1.bf16.msra.mxu0 0
        %543 = vmatprep.subr.bf16.mxu0 0
        %544 = vmatpush1.bf16.msra.mxu0 0
        %545 = vmatprep.subr.bf16.mxu0 0
        %546 = vmatpush1.bf16.msra.mxu0 0
        %547 = vmatprep.subr.bf16.mxu0 0
        %548 = vmatpush1.bf16.msra.mxu0 0
        %549 = vmatprep.subr.bf16.mxu0 0
        %550 = vmatpush1.bf16.msra.mxu0 0
        %551 = vmatprep.subr.bf16.mxu0 0
        %552 = vmatpush1.bf16.msra.mxu0 0
        %553 = vmatprep.subr.bf16.mxu0 0
        %554 = vmatpush1.bf16.msra.mxu0 0
        %555 = vmatprep.subr.bf16.mxu0 0
        %556 = vmatpush1.bf16.msra.mxu0 0
        %557 = vmatprep.mubr.bf16.mxu0 0
        %558 = vmatmul.mubr.bf16.gmra.mrb[0].mxu0 %v520
        %v559 = vpop.f32.mrb[0].mxu0
        %v560 = vadd.f32 0.0, %v559
        %v561 = vpop.f32.mrb[0].mxu0
        %v562 = vpop.f32.mrb[0].mxu0
        %v563 = vpop.f32.mrb[0].mxu0
        %564 = vdwg.mxu0
        %v565 = vadd.f32 %v516, %v560
        %566 = vst.msk [vmem:[#allocation3] sm:$0xff] %vm354, %v565
        %p567 = scmp.eq.s32.totalorder %s25, 3
        // Predicated region
        $region49: #{tpu_custom_call.1} parent=43 // pred_check
          %p568 = pneg %p567
        $region50: #{tpu_custom_call.1} parent=43 // pred_check_branch
          %570 = sbr.rel (%p568) target = $region52
        $region51: #{tpu_custom_call.1} parent=43 // pred_region
          %v571 = vld [vmem:[%s286] sm:$0xff]
          %v572 = vld [vmem:[#allocation3] sm:$0xff]
          %v573 = vadd.f32 %v571, %v572
          %v574 = vld [vmem:[%s5] sm:$0x1]
          %v576 = vlaneseq
          %v577 = vshrl.u32 %v576, 7
          %v578 = vsub.s32 0, %v577
          %v579 = vrot.slane %v574, %v578
          %v581 = vadd.f32 %v573, %v579
          %582 = vst.msk [vmem:[%s282] sm:$0xff] %vm354, %v581
        $region52: #{tpu_custom_call.1} parent=43 // pred_fallthru
          _
        %s583 = sand.u32 %s181, 1
        %s584 = scalar_lea.sflag [#allocation5], %s583
        %s585 = sand.u32 %s181, 1
        %s586 = smul.addr %s585, 8
        %s587 = scalar_lea.vmem [#allocation4], %s586
        // Predicated region
        $region53: #{tpu_custom_call.1} parent=43 // pred_check
          %p588 = pneg %p191
        $region54: #{tpu_custom_call.1} parent=43 // pred_check_branch
          %590 = sbr.rel (%p588) target = $region56
        $region55: #{tpu_custom_call.1} parent=43 // pred_region
          %s592 = ssub.s32 128, 128
          %593 = vsyncadd %s584, %s592
          %s594 = smul.addr %s24, 128
          %s595 = scalar_lea.hbm %s6, %s594
          %s597 = sshll.u32 %s587, 4
          %s598 = int_to_ptr.vmem [resolvable:$true] %s597
          %600 = dma.vmem_to_hbm [thread:$0]  %s598, 128, %s595, %s584
        $region56: #{tpu_custom_call.1} parent=43 // pred_fallthru
          _
      $region44: #{tpu_custom_call.1} parent=5 // pred_fallthru
        _
      %p601 = scmp.le.s32.totalorder 2, %s15
      // Predicated region
      $region57: #{tpu_custom_call.1} parent=5 // pred_check
        %p602 = pneg %p601
      $region58: #{tpu_custom_call.1} parent=5 // pred_check_branch
        %604 = sbr.rel (%p602) target = $region60
      $region59: #{tpu_custom_call.1} parent=5 // pred_region
        %s605 = ssub.s32 %s15, 2
        // Predicated region
        $region61: #{tpu_custom_call.1} parent=59 // pred_check
          %p606 = pneg %p197
        $region62: #{tpu_custom_call.1} parent=59 // pred_check_branch
          %608 = sbr.rel (%p606) target = $region64
        $region63: #{tpu_custom_call.1} parent=59 // pred_region
          %s609 = sand.u32 %s182, 1
          %s610 = scalar_lea.sflag [#allocation5], %s609
          %s611 = sand.u32 %s182, 1
          %s612 = smul.addr %s611, 8
          %s613 = scalar_lea.vmem [#allocation4], %s612
          %614 = dma.done %s610, 128
        $region64: #{tpu_custom_call.1} parent=59 // pred_fallthru
          _
      $region60: #{tpu_custom_call.1} parent=5 // pred_fallthru
        _
    $region6: #{tpu_custom_call.1} parent=1 // loop_footer
      %s19 = sadd.s32 1, %s15
    $region7: #{tpu_custom_call.1} parent=1 // loop_footer_branch
      %14 = sbr.rel target = $region3
    $region8: #{tpu_custom_call.1} parent=1 // loop_exit
      _
    %615 = vsyncpa [#allocation5], 1
    %s616 = scalar_lea.sflag [#allocation5], 1
    %617 = vsyncpa %s616, 1

</llo_original>
